<compile_context>
chip_gen: v7x
topology: tpu7x:2x2x1
jax: 0.10.0
libtpu: 0.0.40
codegen_flags: <defaults>
</compile_context>

<pallas_src>
import functools

import jax
import jax.numpy as jnp
from jax.experimental import pallas as pl
from jax.experimental.pallas import tpu as pltpu


def build_rope_cache(dim: int, max_seq_len: int = 4096, base: int = 10000) -> jnp.ndarray:
    """Equivalent of Phi3RotaryPositionalEmbeddings._rope_init/build_rope_cache.

    Returns [max_seq_len, 2*dim]: cos in the first `dim` cols, sin in the last.
    """
    theta = 1.0 / (base ** (jnp.arange(0, dim, 2, dtype=jnp.float32)[: dim // 2] / dim))
    seq_idx = jnp.arange(max_seq_len, dtype=jnp.float32)
    idx_theta = jnp.einsum("i,j->ij", seq_idx, theta).astype(jnp.float32)   # [S, dim/2]
    freqs = jnp.concatenate([idx_theta, idx_theta], axis=-1)                # [S, dim]
    return jnp.concatenate([jnp.cos(freqs), jnp.sin(freqs)], axis=-1)       # [S, 2*dim]


def _fold_coefficients(cache: jnp.ndarray, seq_len: int, n_h: int, h_d: int) -> jnp.ndarray:
    """Pre-tile cos/sin to the lane-dense folded layout -> [3, seq_len, n_h*h_d] f32.

    plane 0: cos tiled per head
    plane 1: A = -sin on the first half of each head's lanes, 0 elsewhere
    plane 2: B = +sin on the second half of each head's lanes, 0 elsewhere
    """
    half = h_d // 2
    rope = cache[:seq_len]
    cos = rope[:, :h_d].astype(jnp.float32)           # [s, h_d]
    sin = rope[:, h_d: 2 * h_d].astype(jnp.float32)   # [s, h_d]
    cos_t = jnp.tile(cos, (1, n_h))                   # [s, D]
    sin_t = jnp.tile(sin, (1, n_h))                   # [s, D]
    pos = jnp.arange(n_h * h_d, dtype=jnp.int32) % h_d
    first = pos < half                                # within-head first half
    a = jnp.where(first, -sin_t, 0.0)
    b = jnp.where(first, 0.0, sin_t)
    return jnp.stack([cos_t, a, b], axis=0)           # [3, s, D] f32


def _choose_seq_block(s: int, d: int, x_itemsize: int,
                      vmem_budget_bytes: int = 32 * 1024 * 1024) -> int:
    """Largest seq tile (divisor of s) whose double-buffered footprint fits the budget."""
    # per seq-row: double-buffered input + output tiles (x dtype) + 3 f32 coef planes
    bytes_per_row = d * (4 * x_itemsize + 2 * 3 * 4)
    max_rows = max(1, vmem_budget_bytes // max(bytes_per_row, 1))
    if s <= max_rows and s <= 1024:
        return s
    for cand in (1024, 512, 256, 128, 64, 32, 16, 8):
        if cand <= max_rows and s % cand == 0:
            return cand
    return s  # full-sequence block is always a legal BlockSpec


def _phi3_rope_kernel(x_ref, coef_ref, o_ref, *, half: int):
    # x_ref / o_ref: (ts, D) with D = n_h * h_d  (batch dim squeezed away)
    # coef_ref:      (3, ts, D) f32 = [cos_t, A, B]
    x = x_ref[...].astype(jnp.float32)
    cos_t = coef_ref[0]
    a = coef_ref[1]          # -sin on first-half lanes of each head, 0 elsewhere
    b = coef_ref[2]          # +sin on second-half lanes of each head, 0 elsewhere

    d = x.shape[-1]
    # rot_left[:, j]  = x[:, j + half]  (wraparound only lands where a == 0)
    # rot_right[:, j] = x[:, j - half]  (wraparound only lands where b == 0)
    rot_left = jnp.concatenate([x[:, half:], x[:, :half]], axis=1)
    rot_right = jnp.concatenate([x[:, d - half:], x[:, :d - half]], axis=1)

    o_ref[...] = (x * cos_t + rot_left * a + rot_right * b).astype(o_ref.dtype)


def phi3_rope(x: jnp.ndarray, cache: jnp.ndarray, seq_block: int | None = None) -> jnp.ndarray:
    """
    Args:
      x:     [b, s, n_h, h_d]
      cache: [max_seq_len, 2*h_d]  (cos in first h_d cols, sin in last h_d cols)
    Returns:
      [b, s, n_h, h_d] with Phi3 RoPE applied, same dtype as x.
    """
    # TODO(synk): input_pos (incremental-decode gather cache[input_pos]) path not implemented;
    #             this covers the input_pos=None path of the PyTorch module.
    b, s, n_h, h_d = x.shape
    assert h_d % 2 == 0, "head_dim must be even for RoPE"
    d = n_h * h_d
    half = h_d // 2

    x_f = x.reshape(b, s, d)                           # free, contiguous reshape
    coef = _fold_coefficients(cache, s, n_h, h_d)      # [3, s, D] f32

    ts = _choose_seq_block(s, d, x.dtype.itemsize) if seq_block is None else seq_block
    assert s % ts == 0, "seq_block must divide seq_len"
    grid = (s // ts, b)                                # batch innermost: coef block stays resident

    kernel = functools.partial(_phi3_rope_kernel, half=half)

    out_f = pl.pallas_call(
        kernel,
        out_shape=jax.ShapeDtypeStruct((b, s, d), x.dtype),
        grid_spec=pltpu.PrefetchScalarGridSpec(
            num_scalar_prefetch=0,
            grid=grid,
            in_specs=[
                pl.BlockSpec((pl.Squeezed(), ts, d), lambda si, bi: (bi, si, 0)),
                pl.BlockSpec((3, ts, d), lambda si, bi: (0, si, 0)),
            ],
            out_specs=pl.BlockSpec((pl.Squeezed(), ts, d), lambda si, bi: (bi, si, 0)),
        ),
        compiler_params=pltpu.CompilerParams(
            dimension_semantics=("parallel", "parallel"),
            vmem_limit_bytes=48 * 1024 * 1024,
        ),
    )(x_f, coef)

    return out_f.reshape(b, s, n_h, h_d)


def _reference(x, cache):
    """Pure-JAX port of the PyTorch forward for verification."""
    s = x.shape[1]
    h_d = x.shape[-1]
    rope_cache = cache[:s]
    cos = rope_cache[:, :h_d]
    sin = rope_cache[:, h_d:]
    x1 = x[..., : h_d // 2]
    x2 = x[..., h_d // 2:]
    rotated = jnp.concatenate([-x2, x1], axis=-1)
    xt = jnp.swapaxes(x, 1, 2).astype(jnp.float32)          # [b, n_h, s, h_d]
    rt = jnp.swapaxes(rotated, 1, 2).astype(jnp.float32)
    out = xt * cos + rt * sin
    return jnp.swapaxes(out, 1, 2).astype(x.dtype)


if __name__ == "__main__":
    head_dim = 32
    max_seq_len = 64
    base = 10000

    cache = build_rope_cache(head_dim, max_seq_len=max_seq_len, base=base)

    # Case 1: [bsz=2, seq_len=8, num_heads=4, head_dim=32], automatic tiling.
    key = jax.random.PRNGKey(0)
    x = jax.random.normal(key, (2, 8, 4, head_dim), dtype=jnp.float32)
    out = jax.block_until_ready(phi3_rope(x, cache))
    ref = _reference(x, cache)
    assert out.shape == x.shape and out.dtype == x.dtype
    assert jnp.allclose(out, ref, atol=1e-5, rtol=1e-5), "mismatch vs reference (case 1)"

    # Case 2: longer sequence with an explicit seq tile to exercise the seq grid axis.
    key2 = jax.random.PRNGKey(1)
    x2 = jax.random.normal(key2, (2, 16, 4, head_dim), dtype=jnp.float32)
    out2 = jax.block_until_ready(phi3_rope(x2, cache, seq_block=8))
    ref2 = _reference(x2, cache)
    assert out2.shape == x2.shape and out2.dtype == x2.dtype
    assert jnp.allclose(out2, ref2, atol=1e-5, rtol=1e-5), "mismatch vs reference (case 2)"

    print("KERNEL_OK")
</pallas_src>

<mosaic_0001>
module attributes {stable_mosaic.version = 11 : i64} {
  func.func @_phi3_rope_kernel(%arg0: i32, %arg1: i32, %arg2: memref<1x8x128xf32, #tpu.memory_space<vmem>>, %arg3: memref<3x8x128xf32, #tpu.memory_space<vmem>>, %arg4: memref<1x8x128xf32, #tpu.memory_space<vmem>>) attributes {dimension_semantics = [#tpu.dimension_semantics<parallel>, #tpu.dimension_semantics<parallel>], iteration_bounds = array<i64: 1, 2>, scalar_prefetch = 0 : i64, scratch_operands = 0 : i64, tpu.core_type = #tpu.core_type<tc>, window_params = [{transform_indices = @transform_0, window_bounds = array<i64: 1, 8, 128>}, {transform_indices = @transform_1, window_bounds = array<i64: 3, 8, 128>}, {transform_indices = @transform_2, window_bounds = array<i64: 1, 8, 128>}]} {
    %c0 = arith.constant 0 : index
    %c0_0 = arith.constant 0 : index
    %c0_1 = arith.constant 0 : index
    %0 = vector.load %arg2[%c0, %c0_0, %c0_1] : memref<1x8x128xf32, #tpu.memory_space<vmem>>, vector<1x8x128xf32>
    %1 = vector.shape_cast %0 : vector<1x8x128xf32> to vector<8x128xf32>
    %c0_2 = arith.constant 0 : index
    %c0_3 = arith.constant 0 : index
    %c0_4 = arith.constant 0 : index
    %2 = vector.load %arg3[%c0_2, %c0_3, %c0_4] : memref<3x8x128xf32, #tpu.memory_space<vmem>>, vector<1x8x128xf32>
    %3 = vector.shape_cast %2 : vector<1x8x128xf32> to vector<8x128xf32>
    %c1 = arith.constant 1 : index
    %c0_5 = arith.constant 0 : index
    %c0_6 = arith.constant 0 : index
    %4 = vector.load %arg3[%c1, %c0_5, %c0_6] : memref<3x8x128xf32, #tpu.memory_space<vmem>>, vector<1x8x128xf32>
    %5 = vector.shape_cast %4 : vector<1x8x128xf32> to vector<8x128xf32>
    %c2 = arith.constant 2 : index
    %c0_7 = arith.constant 0 : index
    %c0_8 = arith.constant 0 : index
    %6 = vector.load %arg3[%c2, %c0_7, %c0_8] : memref<3x8x128xf32, #tpu.memory_space<vmem>>, vector<1x8x128xf32>
    %7 = vector.shape_cast %6 : vector<1x8x128xf32> to vector<8x128xf32>
    %8 = vector.extract_strided_slice %1 {offsets = [0, 16], sizes = [8, 112], strides = [1, 1]} : vector<8x128xf32> to vector<8x112xf32>
    %9 = vector.extract_strided_slice %1 {offsets = [0, 0], sizes = [8, 16], strides = [1, 1]} : vector<8x128xf32> to vector<8x16xf32>
    %10 = tpu.concatenate %8, %9 in 1 : vector<8x112xf32>, vector<8x16xf32> -> vector<8x128xf32>
    %11 = vector.extract_strided_slice %1 {offsets = [0, 112], sizes = [8, 16], strides = [1, 1]} : vector<8x128xf32> to vector<8x16xf32>
    %12 = vector.extract_strided_slice %1 {offsets = [0, 0], sizes = [8, 112], strides = [1, 1]} : vector<8x128xf32> to vector<8x112xf32>
    %13 = tpu.concatenate %11, %12 in 1 : vector<8x16xf32>, vector<8x112xf32> -> vector<8x128xf32>
    %14 = arith.mulf %1, %3 : vector<8x128xf32>
    %15 = arith.mulf %10, %5 : vector<8x128xf32>
    %16 = arith.addf %14, %15 : vector<8x128xf32>
    %17 = arith.mulf %13, %7 : vector<8x128xf32>
    %18 = arith.addf %16, %17 : vector<8x128xf32>
    %c0_9 = arith.constant 0 : index
    %c0_10 = arith.constant 0 : index
    %c0_11 = arith.constant 0 : index
    %19 = vector.load %arg4[%c0_9, %c0_10, %c0_11] : memref<1x8x128xf32, #tpu.memory_space<vmem>>, vector<1x8x128xf32>
    %20 = vector.shape_cast %19 : vector<1x8x128xf32> to vector<8x128xf32>
    %21 = vector.shape_cast %18 : vector<8x128xf32> to vector<1x8x128xf32>
    tpu.vector_store %arg4[%c0_9, %c0_10, %c0_11], %21 {strides = array<i32>} : memref<1x8x128xf32, #tpu.memory_space<vmem>>, vector<1x8x128xf32>,
    return
  }
  func.func @transform_0(%arg0: i32, %arg1: i32) -> (i32, i32, i32) {
    %c0_i32 = arith.constant 0 : i32
    %c0_i32_0 = arith.constant 0 : i32
    return %arg1, %arg0, %c0_i32 : i32, i32, i32
  }
  func.func @transform_1(%arg0: i32, %arg1: i32) -> (i32, i32, i32) {
    %c0_i32 = arith.constant 0 : i32
    %c0_i32_0 = arith.constant 0 : i32
    %c0_i32_1 = arith.constant 0 : i32
    return %c0_i32, %arg0, %c0_i32_0 : i32, i32, i32
  }
  func.func @transform_2(%arg0: i32, %arg1: i32) -> (i32, i32, i32) {
    %c0_i32 = arith.constant 0 : i32
    %c0_i32_0 = arith.constant 0 : i32
    return %arg1, %arg0, %c0_i32 : i32, i32, i32
  }
}

</mosaic_0001>

<llo_original>
// kernel: tpu_custom_call.1
$region0: #{tpu_custom_call.1}
  #allocation0 [shape = 'u32[]', space=smem, size = 0x4, offset = 0x4, fixed_abs, tag = 'smem constant byte address 0x4 - core index']
  #allocation1 [shape = 'u32[144,128]{1,0:T(1,128)}', space=vmem, size = 0x12000, scoped, tag = 'internal scratch']
  %s0 = inlined_call_operand.hbm [shape: f32[2,8,128], index: 0, kind: input, shape index: {}]
  %s1 = inlined_call_operand.hbm [shape: f32[3,8,128], index: 1, kind: input, shape index: {}]
  %s2 = inlined_call_operand.hbm [shape: f32[2,8,128], index: 2, kind: output, shape index: {}]
  %s3 = sld [smem:[#allocation0]]
  $region49: #{tpu_custom_call.1} parent=0
    _
  %s5 = ssub.s32 1, %s3
  %s6 = scalar_select 0, %s5, %s3
  $region1: #{tpu_custom_call.1} parent=0
    #allocation2 [shape = 'u8[8192]{0}', space=vmem, size = 0x2000, scoped, tag = 'input window, operand 0']
    #allocation3 [shape = 's32[2]{0}', space=sflag, size = 0x8, scoped, tag = 'scoped memory for tpu_custom_call.1']
    #allocation4 [shape = 's32[2]{0}', space=sflag, size = 0x8, scoped, tag = 'scoped memory for tpu_custom_call.1']
    #allocation5 [shape = 'u8[12288]{0}', space=vmem, size = 0x3000, scoped, tag = 'input window, operand 1, single buffered']
    #allocation6 [shape = 's32[1]{0}', space=sflag, size = 0x4, scoped, tag = 'scoped memory for tpu_custom_call.1']
    #allocation7 [shape = 'u8[8192]{0}', space=vmem, size = 0x2000, scoped, tag = 'output window, operand 0']
    %7 = vsyncpa [#allocation3], 0
    %s8 = scalar_lea.sflag [#allocation3], 1
    %9 = vsyncpa %s8, 0
    %10 = vsyncpa [#allocation6], 0
    %11 = vsyncpa [#allocation4], 0
    %s12 = scalar_lea.sflag [#allocation4], 1
    %13 = vsyncpa %s12, 0
    loop: start=0, step=1, limit=4
    $region2: #{tpu_custom_call.1} parent=1 // loop_pre_header
      _
    $region3: #{tpu_custom_call.1} parent=1 // loop_header
      %s15 = sphi 0, %s19
      %p16 = scmp.ge.s32.totalorder %s15, 4
      %s22 = sphi 0, %s34
      %s23 = sphi 0, %s30
      %s24 = sphi 0, %s22
      %s25 = sphi 0, %s23
      %s26 = sphi 0, %s24
      %s27 = sphi 0, %s25
      %s39 = sphi 0, %s41
      %s42 = sphi 0, %s39
      %s43 = sphi 0, %s42
      %s59 = sphi 0, %s43
      %s65 = sphi 0, %s67
      %s68 = sphi 0, %s65
      %s69 = sphi 0, %s68
      %s85 = sphi 0, %s69
      %s93 = sphi 0, %s95
      %s96 = sphi 0, %s93
      %s97 = sphi 0, %s96
      %s113 = sphi 0, %s97
    $region4: #{tpu_custom_call.1} parent=1 // loop_header_branch
      %18 = sbr.rel (%p16) target = $region8
    $region5: #{tpu_custom_call.1} parent=1 // loop_body
      %s20 = ssub.s32 %s15, 1
      %s21 = ssub.s32 %s15, 2
      %s28 = sadd.s32 1, %s23
      %p29 = scmp.ge.s32.totalorder %s28, 2
      %s30 = scalar_select %p29, 0, %s28
      %s31 = sadd.s32 1, %s22
      %s32 = scalar_select %p29, %s31, %s22
      %p33 = scmp.ge.s32.totalorder %s32, 1
      %s34 = scalar_select %p33, 0, %s32
      %s35 = ssub.s32 %s23, %s30
      %s36 = ssub.s32 %s22, %s34
      %s37 = sor.u32 %s35, %s36
      %p38 = scmp.eq.s32.totalorder %s37, 0
      %s40 = sadd.s32 %s39, 1
      %s41 = scalar_select %p38, %s39, %s40
      %p44 = pneg %p38
      %p45 = scmp.eq.s32.totalorder %s15, 1
      %p46 = por %p44, %p45
      %p47 = scmp.ne.s32.totalorder %s39, %s42
      %p48 = scmp.eq.s32.totalorder %s15, 0
      %p49 = por %p47, %p48
      %p50 = scmp.ne.s32.totalorder %s39, %s42
      %p51 = scmp.eq.s32.totalorder %s20, 1
      %p52 = por %p50, %p51
      %p53 = scmp.ne.s32.totalorder %s42, %s43
      %p54 = scmp.eq.s32.totalorder %s20, 0
      %p55 = por %p53, %p54
      %p56 = scmp.ne.s32.totalorder %s42, %s43
      %p57 = scmp.eq.s32.totalorder %s21, 1
      %p58 = por %p56, %p57
      %p60 = scmp.ne.s32.totalorder %s43, %s59
      %p61 = scmp.eq.s32.totalorder %s21, 0
      %p62 = por %p60, %p61
      %s63 = ssub.s32 %s22, %s34
      %p64 = scmp.eq.s32.totalorder %s63, 0
      %s66 = sadd.s32 %s65, 1
      %s67 = scalar_select %p64, %s65, %s66
      %p70 = pneg %p64
      %p71 = scmp.eq.s32.totalorder %s15, 1
      %p72 = por %p70, %p71
      %p73 = scmp.ne.s32.totalorder %s65, %s68
      %p74 = scmp.eq.s32.totalorder %s15, 0
      %p75 = por %p73, %p74
      %p76 = scmp.ne.s32.totalorder %s65, %s68
      %p77 = scmp.eq.s32.totalorder %s20, 1
      %p78 = por %p76, %p77
      %p79 = scmp.ne.s32.totalorder %s68, %s69
      %p80 = scmp.eq.s32.totalorder %s20, 0
      %p81 = por %p79, %p80
      %p82 = scmp.ne.s32.totalorder %s68, %s69
      %p83 = scmp.eq.s32.totalorder %s21, 1
      %p84 = por %p82, %p83
      %p86 = scmp.ne.s32.totalorder %s69, %s85
      %p87 = scmp.eq.s32.totalorder %s21, 0
      %p88 = por %p86, %p87
      %s89 = ssub.s32 %s23, %s30
      %s90 = ssub.s32 %s22, %s34
      %s91 = sor.u32 %s89, %s90
      %p92 = scmp.eq.s32.totalorder %s91, 0
      %s94 = sadd.s32 %s93, 1
      %s95 = scalar_select %p92, %s93, %s94
      %p98 = pneg %p92
      %p99 = scmp.eq.s32.totalorder %s15, 1
      %p100 = por %p98, %p99
      %p101 = scmp.ne.s32.totalorder %s93, %s96
      %p102 = scmp.eq.s32.totalorder %s15, 0
      %p103 = por %p101, %p102
      %p104 = scmp.ne.s32.totalorder %s93, %s96
      %p105 = scmp.eq.s32.totalorder %s20, 1
      %p106 = por %p104, %p105
      %p107 = scmp.ne.s32.totalorder %s96, %s97
      %p108 = scmp.eq.s32.totalorder %s20, 0
      %p109 = por %p107, %p108
      %p110 = scmp.ne.s32.totalorder %s96, %s97
      %p111 = scmp.eq.s32.totalorder %s21, 1
      %p112 = por %p110, %p111
      %p114 = scmp.ne.s32.totalorder %s97, %s113
      %p115 = scmp.eq.s32.totalorder %s21, 0
      %p116 = por %p114, %p115
      %p117 = scmp.le.s32.totalorder 1, %s15
      %p118 = scmp.lt.s32.totalorder %s15, 3
      %p119 = pnand %p117, %p118
      %p120 = pneg %p119
      // Predicated region
      $region9: #{tpu_custom_call.1} parent=5 // pred_check
        _
      $region10: #{tpu_custom_call.1} parent=5 // pred_check_branch
        %122 = sbr.rel (%p119) target = $region12
      $region11: #{tpu_custom_call.1} parent=5 // pred_region
        %s123 = ssub.s32 %s15, 1
        // Predicated region
        $region13: #{tpu_custom_call.1} parent=11 // pred_check
          %p124 = pneg %p81
        $region14: #{tpu_custom_call.1} parent=11 // pred_check_branch
          %126 = sbr.rel (%p124) target = $region16
        $region15: #{tpu_custom_call.1} parent=11 // pred_region
          %s128 = ssub.s32 384, 384
          %129 = vsyncadd [#allocation6], %s128
          %s130 = smul.addr %s24, 128
          %s131 = scalar_lea.hbm %s1, %s130
          %s132 = sshll.u32 [#allocation5], 4
          %s133 = int_to_ptr.vmem [resolvable:$true] %s132
          %138 = dma.hbm_to_vmem [thread:$0]  %s131, 384, %s133, [#allocation6], 128, 128, 8
        $region16: #{tpu_custom_call.1} parent=11 // pred_fallthru
          _
      $region12: #{tpu_custom_call.1} parent=5 // pred_fallthru
        _
      %p139 = scmp.lt.s32.totalorder %s15, 2
      // Predicated region
      $region17: #{tpu_custom_call.1} parent=5 // pred_check
        %p140 = pneg %p139
      $region18: #{tpu_custom_call.1} parent=5 // pred_check_branch
        %142 = sbr.rel (%p140) target = $region20
      $region19: #{tpu_custom_call.1} parent=5 // pred_region
        // Predicated region
        $region21: #{tpu_custom_call.1} parent=19 // pred_check
          %p143 = pneg %p49
        $region22: #{tpu_custom_call.1} parent=19 // pred_check_branch
          %145 = sbr.rel (%p143) target = $region24
        $region23: #{tpu_custom_call.1} parent=19 // pred_region
          %s146 = sand.u32 %s39, 1
          %s147 = scalar_lea.sflag [#allocation3], %s146
          %s148 = sand.u32 %s39, 1
          %s149 = smul.addr %s148, 8
          %s150 = scalar_lea.vmem [#allocation2], %s149
          %s152 = ssub.s32 128, 128
          %153 = vsyncadd %s147, %s152
          %s154 = sadd.s32 %s22, %s23
          %s155 = smul.addr %s154, 128
          %s156 = scalar_lea.hbm %s0, %s155
          %s158 = sshll.u32 %s150, 4
          %s159 = int_to_ptr.vmem [resolvable:$true] %s158
          %161 = dma.hbm_to_vmem [thread:$0]  %s156, 128, %s159, %s147
        $region24: #{tpu_custom_call.1} parent=19 // pred_fallthru
          _
      $region20: #{tpu_custom_call.1} parent=5 // pred_fallthru
        _
      %p162 = scmp.le.s32.totalorder 1, %s15
      %p163 = scmp.lt.s32.totalorder %s15, 3
      %p164 = pnand %p162, %p163
      %p165 = pneg %p164
      // Predicated region
      $region25: #{tpu_custom_call.1} parent=5 // pred_check
        _
      $region26: #{tpu_custom_call.1} parent=5 // pred_check_branch
        %167 = sbr.rel (%p164) target = $region28
      $region27: #{tpu_custom_call.1} parent=5 // pred_region
        %s168 = ssub.s32 %s15, 1
        %s169 = sand.u32 %s42, 1
        %s170 = scalar_lea.sflag [#allocation3], %s169
        %s171 = sand.u32 %s42, 1
        %s172 = smul.addr %s171, 8
        %s173 = scalar_lea.vmem [#allocation2], %s172
        // Predicated region
        $region29: #{tpu_custom_call.1} parent=27 // pred_check
          %p174 = pneg %p55
        $region30: #{tpu_custom_call.1} parent=27 // pred_check_branch
          %176 = sbr.rel (%p174) target = $region32
        $region31: #{tpu_custom_call.1} parent=27 // pred_region
          %177 = dma.done %s170, 128
        $region32: #{tpu_custom_call.1} parent=27 // pred_fallthru
          _
        // Predicated region
        $region33: #{tpu_custom_call.1} parent=27 // pred_check
          %p178 = pneg %p81
        $region34: #{tpu_custom_call.1} parent=27 // pred_check_branch
          %180 = sbr.rel (%p178) target = $region36
        $region35: #{tpu_custom_call.1} parent=27 // pred_region
          %181 = dma.done [#allocation6], 384
        $region36: #{tpu_custom_call.1} parent=27 // pred_fallthru
          _
        %s182 = sand.u32 %s42, 1
        %s183 = scalar_lea.sflag [#allocation3], %s182
        %s184 = sand.u32 %s42, 1
        %s185 = smul.addr %s184, 8
        %s186 = scalar_lea.vmem [#allocation2], %s185
        %p187 = pneg %p55
        %p188 = pneg %p52
        %p189 = pneg %p81
        %p190 = pneg %p78
        %p191 = pneg %p109
        %p192 = pneg %p106
        %s193 = sand.u32 %s96, 1
        %s194 = scalar_lea.sflag [#allocation4], %s193
        %s195 = sand.u32 %s96, 1
        %s196 = smul.addr %s195, 8
        %s197 = scalar_lea.vmem [#allocation7], %s196
        %v198 = vld [vmem:[%s173] sm:$0xff]
        %v199 = vld [vmem:[#allocation5] sm:$0xff]
        %s200 = scalar_lea.vmem [#allocation5], 8
        %v201 = vld [vmem:[%s200] sm:$0xff]
        %s202 = scalar_lea.vmem [#allocation5], 16
        %v203 = vld [vmem:[%s202] sm:$0xff]
        %205 = vrot.lane.b32.xlu0 %v198, 112
        %v206 = vpop.permute.xlu0 %205
        %208 = vrot.lane.b32.xlu0 %v198, 16
        %v209 = vpop.permute.xlu0 %208
        %v211 = vmul.f32 %v198, %v199
        %v212 = vmul.f32 %v206, %v201
        %v213 = vadd.f32 %v211, %v212
        %v214 = vmul.f32 %v209, %v203
        %v215 = vadd.f32 %v213, %v214
        %216 = vst [vmem:[%s197] sm:$0xff] %v215
        %s217 = sand.u32 %s96, 1
        %s218 = scalar_lea.sflag [#allocation4], %s217
        %s219 = sand.u32 %s96, 1
        %s220 = smul.addr %s219, 8
        %s221 = scalar_lea.vmem [#allocation7], %s220
        // Predicated region
        $region37: #{tpu_custom_call.1} parent=27 // pred_check
          %p222 = pneg %p106
        $region38: #{tpu_custom_call.1} parent=27 // pred_check_branch
          %224 = sbr.rel (%p222) target = $region40
        $region39: #{tpu_custom_call.1} parent=27 // pred_region
          %s226 = ssub.s32 128, 128
          %227 = vsyncadd %s218, %s226
          %s228 = sadd.s32 %s24, %s25
          %s229 = smul.addr %s228, 128
          %s230 = scalar_lea.hbm %s2, %s229
          %s232 = sshll.u32 %s221, 4
          %s233 = int_to_ptr.vmem [resolvable:$true] %s232
          %235 = dma.vmem_to_hbm [thread:$0]  %s233, 128, %s230, %s218
        $region40: #{tpu_custom_call.1} parent=27 // pred_fallthru
          _
      $region28: #{tpu_custom_call.1} parent=5 // pred_fallthru
        _
      %p236 = scmp.le.s32.totalorder 2, %s15
      // Predicated region
      $region41: #{tpu_custom_call.1} parent=5 // pred_check
        %p237 = pneg %p236
      $region42: #{tpu_custom_call.1} parent=5 // pred_check_branch
        %239 = sbr.rel (%p237) target = $region44
      $region43: #{tpu_custom_call.1} parent=5 // pred_region
        %s240 = ssub.s32 %s15, 2
        // Predicated region
        $region45: #{tpu_custom_call.1} parent=43 // pred_check
          %p241 = pneg %p112
        $region46: #{tpu_custom_call.1} parent=43 // pred_check_branch
          %243 = sbr.rel (%p241) target = $region48
        $region47: #{tpu_custom_call.1} parent=43 // pred_region
          %s244 = sand.u32 %s97, 1
          %s245 = scalar_lea.sflag [#allocation4], %s244
          %s246 = sand.u32 %s97, 1
          %s247 = smul.addr %s246, 8
          %s248 = scalar_lea.vmem [#allocation7], %s247
          %249 = dma.done %s245, 128
        $region48: #{tpu_custom_call.1} parent=43 // pred_fallthru
          _
      $region44: #{tpu_custom_call.1} parent=5 // pred_fallthru
        _
    $region6: #{tpu_custom_call.1} parent=1 // loop_footer
      %s19 = sadd.s32 1, %s15
    $region7: #{tpu_custom_call.1} parent=1 // loop_footer_branch
      %14 = sbr.rel target = $region3
    $region8: #{tpu_custom_call.1} parent=1 // loop_exit
      _
    %250 = vsyncpa [#allocation3], 1
    %s251 = scalar_lea.sflag [#allocation3], 1
    %252 = vsyncpa %s251, 1
    %253 = vsyncpa [#allocation6], 1
    %254 = vsyncpa [#allocation4], 1
    %s255 = scalar_lea.sflag [#allocation4], 1
    %256 = vsyncpa %s255, 1

</llo_original>
